<compile_context>
chip_gen: v7x
topology: tpu7x:2x2x1
jax: 0.10.0
libtpu: 0.0.40
codegen_flags: <defaults>
</compile_context>

<pallas_src>
import math

import jax
import jax.numpy as jnp
from jax import lax
from jax.experimental import pallas as pl
from jax.experimental.pallas import tpu as pltpu

P = 7            # input features
Y = 5            # output features
H1 = 16 + P      # 23
H2 = 32 + P      # 39
H1P = 24         # sublane-aligned (multiple of 8) hidden sizes
H2P = 40

_LANE = 128


def _round_up(n, m):
    return (n + m - 1) // m * m


def mlp_kernel(x_ref, w1_ref, b1_ref, w2_ref, b2_ref, w3_ref, b3_ref, o_ref):
    # x_ref: (TB, P) row-major batch tile.  w*: (out, in) zero-padded,
    # b*: (out, 1).  o_ref: (Y, TB) -> the batch rides the 128-lane axis for
    # every matmul / ReLU / tanh and the output store is lane-dense.
    x = x_ref[...]                                               # (TB, P)

    # Layer 1: h1[m, b] = sum_k W1[m, k] * x[b, k] -- rhs-transposed
    # contraction (q.kT pattern), so x never needs an explicit transpose.
    h1 = lax.dot_general(w1_ref[...], x, (((1,), (1,)), ((), ())),
                         preferred_element_type=jnp.float32)
    h1 = jnp.maximum(h1 + b1_ref[...], 0.0)                      # (H1P, TB) ReLU

    h2 = jnp.dot(w2_ref[...], h1, preferred_element_type=jnp.float32)
    h2 = jnp.maximum(h2 + b2_ref[...], 0.0)                      # (H2P, TB) ReLU

    o = jnp.dot(w3_ref[...], h2, preferred_element_type=jnp.float32)
    o_ref[...] = jnp.tanh(o + b3_ref[...]).astype(o_ref.dtype)   # (Y, TB) Tanh (EUP)


def _prep_params(params):
    """PyTorch nn.Linear layout (W: (out,in), b: (out,)), zero-padded so the
    hidden activations are sublane (8-row) aligned.  Padded rows stay exactly
    zero through ReLU and contribute nothing downstream."""
    f32 = jnp.float32
    w1 = jnp.zeros((H1P, P), f32).at[:H1, :].set(params["w1"].astype(f32))
    b1 = jnp.zeros((H1P, 1), f32).at[:H1, 0].set(params["b1"].astype(f32))
    w2 = jnp.zeros((H2P, H1P), f32).at[:H2, :H1].set(params["w2"].astype(f32))
    b2 = jnp.zeros((H2P, 1), f32).at[:H2, 0].set(params["b2"].astype(f32))
    w3 = jnp.zeros((Y, H2P), f32).at[:, :H2].set(params["w3"].astype(f32))
    b3 = params["b3"].astype(f32).reshape(Y, 1)
    return w1, b1, w2, b2, w3, b3


def _pick_tile_b(batch, tile_b_max):
    tile_b_max = max(_LANE, _round_up(tile_b_max, _LANE))
    if batch <= 1024:
        # Tiny-batch fast path: one block, one grid step, no padding logic.
        return batch
    # Lane-aligned tile, capped, and chosen so the grid has >= 2 steps
    # (keeps both v7x TensorCores busy via the "parallel" batch axis).
    return min(tile_b_max, _round_up(pl.cdiv(batch, 2), _LANE))


def neural_network_forward(x, params, *, tile_b=8192):
    """x: (B, P) float32. params: PyTorch-layout weights W (out,in), biases b (out,)."""
    batch = x.shape[0]
    x = x.astype(jnp.float32)
    w1, b1, w2, b2, w3, b3 = _prep_params(params)

    tb = _pick_tile_b(batch, tile_b)
    grid = (pl.cdiv(batch, tb),)

    cost = pl.CostEstimate(
        flops=2 * batch * (P * H1 + H1 * H2 + H2 * Y),
        transcendentals=batch * Y,
        bytes_accessed=4 * (batch * (P + Y)
                            + H1 * P + H2 * H1 + Y * H2 + H1 + H2 + Y),
    )

    out_fm = pl.pallas_call(
        mlp_kernel,
        out_shape=jax.ShapeDtypeStruct((Y, batch), jnp.float32),
        grid=grid,
        in_specs=[
            pl.BlockSpec((tb, P), lambda i: (i, 0)),       # x tile, streamed
            pl.BlockSpec((H1P, P), lambda i: (0, 0)),      # weights / biases stay
            pl.BlockSpec((H1P, 1), lambda i: (0, 0)),      # VMEM-resident across
            pl.BlockSpec((H2P, H1P), lambda i: (0, 0)),    # grid steps
            pl.BlockSpec((H2P, 1), lambda i: (0, 0)),
            pl.BlockSpec((Y, H2P), lambda i: (0, 0)),
            pl.BlockSpec((Y, 1), lambda i: (0, 0)),
        ],
        out_specs=pl.BlockSpec((Y, tb), lambda i: (0, i)),
        compiler_params=pltpu.CompilerParams(
            dimension_semantics=("parallel",),             # megacore split on v7x
            vmem_limit_bytes=32 * 1024 * 1024,
        ),
        cost_estimate=cost,
    )(x, w1, b1, w2, b2, w3, b3)

    # Back to (B, Y) row-major -- the only remaining XLA-side op.
    # TODO(synk): fold this (Y,B)->(B,Y) transpose into the kernel (XLU
    # transpose of the (Y, tile_b) block) if a fully fused row-major output
    # is required by the consumer.
    return out_fm.T


def init_params(key):
    """Deterministic init mimicking PyTorch nn.Linear defaults (uniform +-1/sqrt(fan_in))."""
    ks = jax.random.split(key, 6)

    def lin(kw, kb, fan_in, fan_out):
        bound = 1.0 / math.sqrt(fan_in)
        w = jax.random.uniform(kw, (fan_out, fan_in), jnp.float32, -bound, bound)
        b = jax.random.uniform(kb, (fan_out,), jnp.float32, -bound, bound)
        return w, b

    w1, b1 = lin(ks[0], ks[1], P, H1)
    w2, b2 = lin(ks[2], ks[3], H1, H2)
    w3, b3 = lin(ks[4], ks[5], H2, Y)
    return {"w1": w1, "b1": b1, "w2": w2, "b2": b2, "w3": w3, "b3": b3}


if __name__ == "__main__":
    key = jax.random.PRNGKey(0)
    k_params, k_x, k_x2 = jax.random.split(key, 3)

    params = init_params(k_params)

    def reference(xv):
        hp = lax.Precision.HIGHEST
        h1 = jnp.maximum(jnp.dot(xv, params["w1"].T, precision=hp) + params["b1"], 0.0)
        h2 = jnp.maximum(jnp.dot(h1, params["w2"].T, precision=hp) + params["b2"], 0.0)
        return jnp.tanh(jnp.dot(h2, params["w3"].T, precision=hp) + params["b3"])

    # Small batch (single-block fast path), matching the module's demo scale.
    x = jax.random.normal(k_x, (8, P), dtype=jnp.float32)
    out = neural_network_forward(x, params)
    jax.block_until_ready(out)
    assert out.shape == (8, Y)
    assert jnp.allclose(out, reference(x), atol=1e-4, rtol=1e-4)

    # Larger batch exercising the multi-step grid and the ragged last block.
    x2 = jax.random.normal(k_x2, (2500, P), dtype=jnp.float32)
    out2 = neural_network_forward(x2, params)
    jax.block_until_ready(out2)
    assert out2.shape == (2500, Y)
    assert jnp.allclose(out2, reference(x2), atol=1e-4, rtol=1e-4)

    print("KERNEL_OK")
</pallas_src>

<mosaic_0001>
module attributes {stable_mosaic.version = 11 : i64} {
  func.func @mlp_kernel(%arg0: i32, %arg1: memref<8x7xf32, #tpu.memory_space<vmem>>, %arg2: memref<24x7xf32, #tpu.memory_space<vmem>>, %arg3: memref<24x1xf32, #tpu.memory_space<vmem>>, %arg4: memref<40x24xf32, #tpu.memory_space<vmem>>, %arg5: memref<40x1xf32, #tpu.memory_space<vmem>>, %arg6: memref<5x40xf32, #tpu.memory_space<vmem>>, %arg7: memref<5x1xf32, #tpu.memory_space<vmem>>, %arg8: memref<5x8xf32, #tpu.memory_space<vmem>>) attributes {dimension_semantics = [#tpu.dimension_semantics<parallel>], iteration_bounds = array<i64: 1>, scalar_prefetch = 0 : i64, scratch_operands = 0 : i64, tpu.core_type = #tpu.core_type<tc>, window_params = [{transform_indices = @transform_0, window_bounds = array<i64: 8, 7>}, {pipeline_mode = #tpu.pipeline_mode<synchronous>, transform_indices = @transform_1, window_bounds = array<i64: 24, 7>}, {pipeline_mode = #tpu.pipeline_mode<synchronous>, transform_indices = @transform_2, window_bounds = array<i64: 24, 1>}, {pipeline_mode = #tpu.pipeline_mode<synchronous>, transform_indices = @transform_3, window_bounds = array<i64: 40, 24>}, {pipeline_mode = #tpu.pipeline_mode<synchronous>, transform_indices = @transform_4, window_bounds = array<i64: 40, 1>}, {pipeline_mode = #tpu.pipeline_mode<synchronous>, transform_indices = @transform_5, window_bounds = array<i64: 5, 40>}, {pipeline_mode = #tpu.pipeline_mode<synchronous>, transform_indices = @transform_6, window_bounds = array<i64: 5, 1>}, {transform_indices = @transform_7, window_bounds = array<i64: 5, 8>}]} {
    %c0 = arith.constant 0 : index
    %c0_0 = arith.constant 0 : index
    %0 = vector.load %arg1[%c0, %c0_0] : memref<8x7xf32, #tpu.memory_space<vmem>>, vector<8x7xf32>
    %c0_1 = arith.constant 0 : index
    %c0_2 = arith.constant 0 : index
    %1 = vector.load %arg2[%c0_1, %c0_2] : memref<24x7xf32, #tpu.memory_space<vmem>>, vector<24x7xf32>
    %cst = arith.constant dense<0.000000e+00> : vector<24x8xf32>
    %2 = tpu.matmul %1, %0, %cst {dimension_numbers = #tpu.dot_dimension_numbers<[1], [1], [0], [0], [0, 0, 1, 0], [], []>} : vector<24x7xf32>, vector<8x7xf32>, vector<24x8xf32> -> vector<24x8xf32>
    %c0_3 = arith.constant 0 : index
    %c0_4 = arith.constant 0 : index
    %3 = vector.load %arg3[%c0_3, %c0_4] : memref<24x1xf32, #tpu.memory_space<vmem>>, vector<24x1xf32>
    %4 = vector.broadcast %3 : vector<24x1xf32> to vector<24x8xf32>
    %5 = arith.addf %2, %4 : vector<24x8xf32>
    %cst_5 = arith.constant 0.000000e+00 : f32
    %6 = vector.broadcast %cst_5 : f32 to vector<24x8xf32>
    %7 = arith.maximumf %5, %6 : vector<24x8xf32>
    %c0_6 = arith.constant 0 : index
    %c0_7 = arith.constant 0 : index
    %8 = vector.load %arg4[%c0_6, %c0_7] : memref<40x24xf32, #tpu.memory_space<vmem>>, vector<40x24xf32>
    %cst_8 = arith.constant dense<0.000000e+00> : vector<40x8xf32>
    %9 = tpu.matmul %8, %7, %cst_8 {dimension_numbers = #tpu.dot_dimension_numbers<[1], [0], [0], [1], [0, 0, 1, 1], [], []>} : vector<40x24xf32>, vector<24x8xf32>, vector<40x8xf32> -> vector<40x8xf32>
    %c0_9 = arith.constant 0 : index
    %c0_10 = arith.constant 0 : index
    %10 = vector.load %arg5[%c0_9, %c0_10] : memref<40x1xf32, #tpu.memory_space<vmem>>, vector<40x1xf32>
    %11 = vector.broadcast %10 : vector<40x1xf32> to vector<40x8xf32>
    %12 = arith.addf %9, %11 : vector<40x8xf32>
    %cst_11 = arith.constant 0.000000e+00 : f32
    %13 = vector.broadcast %cst_11 : f32 to vector<40x8xf32>
    %14 = arith.maximumf %12, %13 : vector<40x8xf32>
    %c0_12 = arith.constant 0 : index
    %c0_13 = arith.constant 0 : index
    %15 = vector.load %arg6[%c0_12, %c0_13] : memref<5x40xf32, #tpu.memory_space<vmem>>, vector<5x40xf32>
    %cst_14 = arith.constant dense<0.000000e+00> : vector<5x8xf32>
    %16 = tpu.matmul %15, %14, %cst_14 {dimension_numbers = #tpu.dot_dimension_numbers<[1], [0], [0], [1], [0, 0, 1, 1], [], []>} : vector<5x40xf32>, vector<40x8xf32>, vector<5x8xf32> -> vector<5x8xf32>
    %c0_15 = arith.constant 0 : index
    %c0_16 = arith.constant 0 : index
    %17 = vector.load %arg7[%c0_15, %c0_16] : memref<5x1xf32, #tpu.memory_space<vmem>>, vector<5x1xf32>
    %18 = vector.broadcast %17 : vector<5x1xf32> to vector<5x8xf32>
    %19 = arith.addf %16, %18 : vector<5x8xf32>
    %20 = math.tanh %19 : vector<5x8xf32>
    %c0_17 = arith.constant 0 : index
    %c0_18 = arith.constant 0 : index
    %21 = vector.load %arg8[%c0_17, %c0_18] : memref<5x8xf32, #tpu.memory_space<vmem>>, vector<5x8xf32>
    tpu.vector_store %arg8[%c0_17, %c0_18], %20 {strides = array<i32>} : memref<5x8xf32, #tpu.memory_space<vmem>>, vector<5x8xf32>,
    return
  }
  func.func @transform_0(%arg0: i32) -> (i32, i32) {
    %c0_i32 = arith.constant 0 : i32
    %c0_i32_0 = arith.constant 0 : i32
    return %arg0, %c0_i32 : i32, i32
  }
  func.func @transform_1(%arg0: i32) -> (i32, i32) {
    %c0_i32 = arith.constant 0 : i32
    %c0_i32_0 = arith.constant 0 : i32
    %c0_i32_1 = arith.constant 0 : i32
    return %c0_i32, %c0_i32_0 : i32, i32
  }
  func.func @transform_2(%arg0: i32) -> (i32, i32) {
    %c0_i32 = arith.constant 0 : i32
    %c0_i32_0 = arith.constant 0 : i32
    %c0_i32_1 = arith.constant 0 : i32
    return %c0_i32, %c0_i32_0 : i32, i32
  }
  func.func @transform_3(%arg0: i32) -> (i32, i32) {
    %c0_i32 = arith.constant 0 : i32
    %c0_i32_0 = arith.constant 0 : i32
    %c0_i32_1 = arith.constant 0 : i32
    return %c0_i32, %c0_i32_0 : i32, i32
  }
  func.func @transform_4(%arg0: i32) -> (i32, i32) {
    %c0_i32 = arith.constant 0 : i32
    %c0_i32_0 = arith.constant 0 : i32
    %c0_i32_1 = arith.constant 0 : i32
    return %c0_i32, %c0_i32_0 : i32, i32
  }
  func.func @transform_5(%arg0: i32) -> (i32, i32) {
    %c0_i32 = arith.constant 0 : i32
    %c0_i32_0 = arith.constant 0 : i32
    %c0_i32_1 = arith.constant 0 : i32
    return %c0_i32, %c0_i32_0 : i32, i32
  }
  func.func @transform_6(%arg0: i32) -> (i32, i32) {
    %c0_i32 = arith.constant 0 : i32
    %c0_i32_0 = arith.constant 0 : i32
    %c0_i32_1 = arith.constant 0 : i32
    return %c0_i32, %c0_i32_0 : i32, i32
  }
  func.func @transform_7(%arg0: i32) -> (i32, i32) {
    %c0_i32 = arith.constant 0 : i32
    %c0_i32_0 = arith.constant 0 : i32
    return %c0_i32, %arg0 : i32, i32
  }
}

</mosaic_0001>

<llo_original>
// kernel: tpu_custom_call.1
$region0: #{tpu_custom_call.1}
  #allocation0 [shape = 'u32[]', space=smem, size = 0x4, offset = 0x4, fixed_abs, tag = 'smem constant byte address 0x4 - core index']
  #allocation1 [shape = 'u32[144,128]{1,0:T(1,128)}', space=vmem, size = 0x12000, scoped, tag = 'internal scratch']
  %s0 = inlined_call_operand.vmem [shape: f32[8,7], index: 0, kind: input, shape index: {}]
  %s1 = inlined_call_operand.vmem [shape: f32[24,7], index: 1, kind: input, shape index: {}]
  %s2 = inlined_call_operand.vmem [shape: f32[24,1], index: 2, kind: input, shape index: {}]
  %s3 = inlined_call_operand.vmem [shape: f32[40,24], index: 3, kind: input, shape index: {}]
  %s4 = inlined_call_operand.vmem [shape: f32[40,1], index: 4, kind: input, shape index: {}]
  %s5 = inlined_call_operand.vmem [shape: f32[5,40], index: 5, kind: input, shape index: {}]
  %s6 = inlined_call_operand.vmem [shape: f32[5,1], index: 6, kind: input, shape index: {}]
  %s7 = inlined_call_operand.hbm [shape: f32[5,8], index: 7, kind: output, shape index: {}]
  %s8 = sld [smem:[#allocation0]]
  $region38: #{tpu_custom_call.1} parent=0
    _
  %s10 = ssub.s32 1, %s8
  %s11 = scalar_select 0, %s10, %s8
  $region1: #{tpu_custom_call.1} parent=0
    #allocation2 [shape = 'u8[4096]{0}', space=vmem, size = 0x1000, scoped, tag = 'output window, operand 0, single buffered']
    #allocation3 [shape = 's32[1]{0}', space=sflag, size = 0x4, scoped, tag = 'scoped memory for tpu_custom_call.1']
    %12 = vsyncpa [#allocation3], 0
    // Predicated region
    $region2: #{tpu_custom_call.1} parent=1 // pred_check
      _
    $region3: #{tpu_custom_call.1} parent=1 // pred_check_branch
      %14 = sbr.rel (0) target = $region5
    $region4: #{tpu_custom_call.1} parent=1 // pred_region
      _
    $region5: #{tpu_custom_call.1} parent=1 // pred_fallthru
      _
    // Predicated region
    $region6: #{tpu_custom_call.1} parent=1 // pred_check
      _
    $region7: #{tpu_custom_call.1} parent=1 // pred_check_branch
      %16 = sbr.rel (0) target = $region9
    $region8: #{tpu_custom_call.1} parent=1 // pred_region
      _
    $region9: #{tpu_custom_call.1} parent=1 // pred_fallthru
      _
    // Predicated region
    $region10: #{tpu_custom_call.1} parent=1 // pred_check
      _
    $region11: #{tpu_custom_call.1} parent=1 // pred_check_branch
      %18 = sbr.rel (0) target = $region13
    $region12: #{tpu_custom_call.1} parent=1 // pred_region
      _
    $region13: #{tpu_custom_call.1} parent=1 // pred_fallthru
      _
    // Predicated region
    $region14: #{tpu_custom_call.1} parent=1 // pred_check
      _
    $region15: #{tpu_custom_call.1} parent=1 // pred_check_branch
      %20 = sbr.rel (0) target = $region17
    $region16: #{tpu_custom_call.1} parent=1 // pred_region
      _
    $region17: #{tpu_custom_call.1} parent=1 // pred_fallthru
      _
    // Predicated region
    $region18: #{tpu_custom_call.1} parent=1 // pred_check
      _
    $region19: #{tpu_custom_call.1} parent=1 // pred_check_branch
      %22 = sbr.rel (0) target = $region21
    $region20: #{tpu_custom_call.1} parent=1 // pred_region
      _
    $region21: #{tpu_custom_call.1} parent=1 // pred_fallthru
      _
    // Predicated region
    $region22: #{tpu_custom_call.1} parent=1 // pred_check
      _
    $region23: #{tpu_custom_call.1} parent=1 // pred_check_branch
      %24 = sbr.rel (0) target = $region25
    $region24: #{tpu_custom_call.1} parent=1 // pred_region
      _
    $region25: #{tpu_custom_call.1} parent=1 // pred_fallthru
      _
    // Predicated region
    $region26: #{tpu_custom_call.1} parent=1 // pred_check
      _
    $region27: #{tpu_custom_call.1} parent=1 // pred_check_branch
      %26 = sbr.rel (0) target = $region29
    $region28: #{tpu_custom_call.1} parent=1 // pred_region
      _
    $region29: #{tpu_custom_call.1} parent=1 // pred_fallthru
      _
    %v27 = vld [vmem:[%s0] sm:$0xff]
    %v28 = vld [vmem:[%s1] sm:$0xff]
    %v29 = vld [vmem:[%s1 + $0x8] sm:$0xff]
    %v30 = vld [vmem:[%s1 + $0x10] sm:$0xff]
    %v31 = vld [vmem:[%s2] sm:$0xff]
    %v32 = vld [vmem:[%s2 + $0x8] sm:$0xff]
    %v33 = vld [vmem:[%s2 + $0x10] sm:$0xff]
    %35 = vset.pattern.permute.xlu0 0
    %36 = vperm.xlu0 %35, %v31
    %v37 = vpop.permute.xlu0 %36
    %40 = vset.pattern.permute.xlu0 0
    %41 = vperm.xlu0 %40, %v32
    %v42 = vpop.permute.xlu0 %41
    %45 = vset.pattern.permute.xlu0 0
    %46 = vperm.xlu0 %45, %v33
    %v47 = vpop.permute.xlu0 %46
    %vm49 = vcmask 56320
    %v51 = vsel %vm49, %v28, 0
    %v54 = vsel %vm49, %v29, 0
    %v57 = vsel %vm49, %v30, 0
    %v60 = vsel %vm49, %v27, 0
    %62 = vmatprep.subr.mxu0 0.0
    %63 = vmatpush1.xpose.msra.mxu0 %v60
    %64 = vmatprep.subr.mxu0 0.0
    %65 = vmatpush1.xpose.msra.mxu0 0.0
    %66 = vmatprep.subr.mxu0 0.0
    %67 = vmatpush1.xpose.msra.mxu0 0.0
    %68 = vmatprep.subr.mxu0 0.0
    %69 = vmatpush1.xpose.msra.mxu0 0.0
    %70 = vmatprep.subr.mxu0 0.0
    %71 = vmatpush1.xpose.msra.mxu0 0.0
    %72 = vmatprep.subr.mxu0 0.0
    %73 = vmatpush1.xpose.msra.mxu0 0.0
    %74 = vmatprep.subr.mxu0 0.0
    %75 = vmatpush1.xpose.msra.mxu0 0.0
    %76 = vmatprep.subr.mxu0 0.0
    %77 = vmatpush1.xpose.msra.mxu0 0.0
    %78 = vmatprep.subr.mxu0 0.0
    %79 = vmatpush1.xpose.msra.mxu0 0.0
    %80 = vmatprep.subr.mxu0 0.0
    %81 = vmatpush1.xpose.msra.mxu0 0.0
    %82 = vmatprep.subr.mxu0 0.0
    %83 = vmatpush1.xpose.msra.mxu0 0.0
    %84 = vmatprep.subr.mxu0 0.0
    %85 = vmatpush1.xpose.msra.mxu0 0.0
    %86 = vmatprep.subr.mxu0 0.0
    %87 = vmatpush1.xpose.msra.mxu0 0.0
    %88 = vmatprep.subr.mxu0 0.0
    %89 = vmatpush1.xpose.msra.mxu0 0.0
    %90 = vmatprep.subr.mxu0 0.0
    %91 = vmatpush1.xpose.msra.mxu0 0.0
    %92 = vmatprep.subr.mxu0 0.0
    %93 = vmatpush1.xpose.msra.mxu0 0.0
    %94 = vmatprep.subr.mxu0 0.0
    %95 = vmatpush1.xpose.msra.mxu0 0.0
    %96 = vmatprep.subr.mxu0 0.0
    %97 = vmatpush1.xpose.msra.mxu0 0.0
    %98 = vmatprep.subr.mxu0 0.0
    %99 = vmatpush1.xpose.msra.mxu0 0.0
    %100 = vmatprep.subr.mxu0 0.0
    %101 = vmatpush1.xpose.msra.mxu0 0.0
    %102 = vmatprep.subr.mxu0 0.0
    %103 = vmatpush1.xpose.msra.mxu0 0.0
    %104 = vmatprep.subr.mxu0 0.0
    %105 = vmatpush1.xpose.msra.mxu0 0.0
    %106 = vmatprep.subr.mxu0 0.0
    %107 = vmatpush1.xpose.msra.mxu0 0.0
    %108 = vmatprep.subr.mxu0 0.0
    %109 = vmatpush1.xpose.msra.mxu0 0.0
    %110 = vmatprep.subr.mxu0 0.0
    %111 = vmatpush1.xpose.msra.mxu0 0.0
    %112 = vmatprep.subr.mxu0 0.0
    %113 = vmatpush1.xpose.msra.mxu0 0.0
    %114 = vmatprep.subr.mxu0 0.0
    %115 = vmatpush1.xpose.msra.mxu0 0.0
    %116 = vmatprep.subr.mxu0 0.0
    %117 = vmatpush1.xpose.msra.mxu0 0.0
    %118 = vmatprep.subr.mxu0 0.0
    %119 = vmatpush1.xpose.msra.mxu0 0.0
    %120 = vmatprep.subr.mxu0 0.0
    %121 = vmatpush1.xpose.msra.mxu0 0.0
    %122 = vmatprep.subr.mxu0 0.0
    %123 = vmatpush1.xpose.msra.mxu0 0.0
    %124 = vmatprep.subr.mxu0 0.0
    %125 = vmatpush1.xpose.msra.mxu0 0.0
    %126 = vmatprep.mubr.f32.mxu0 0.0
    %127 = vmatmul.mubr.f32.gmra.mrb[0].mxu0 %v51
    %v128 = vpop.f32.mrb[0].mxu0
    %v129 = vadd.f32 %v37, %v128
    %v130 = vpop.f32.mrb[0].mxu0
    %131 = vmatprep.mubr.f32.mxu0 0.0
    %132 = vmatmul.mubr.f32.gmra.mrb[0].mxu0 %v54
    %v133 = vpop.f32.mrb[0].mxu0
    %v134 = vadd.f32 %v42, %v133
    %v135 = vpop.f32.mrb[0].mxu0
    %136 = vmatprep.mubr.f32.mxu0 0.0
    %137 = vmatmul.mubr.f32.gmra.mrb[0].mxu0 %v57
    %v138 = vpop.f32.mrb[0].mxu0
    %v139 = vadd.f32 %v47, %v138
    %v140 = vpop.f32.mrb[0].mxu0
    %141 = vdwg.mxu0
    %v142 = vmax.f32 %v129, 0.0
    %v143 = vmax.f32 %v134, 0.0
    %v144 = vmax.f32 %v139, 0.0
    %v145 = vld [vmem:[%s3] sm:$0xff]
    %v146 = vld [vmem:[%s3 + $0x8] sm:$0xff]
    %v147 = vld [vmem:[%s3 + $0x10] sm:$0xff]
    %v148 = vld [vmem:[%s3 + $0x18] sm:$0xff]
    %v149 = vld [vmem:[%s3 + $0x20] sm:$0xff]
    %v150 = vld [vmem:[%s4] sm:$0xff]
    %v151 = vld [vmem:[%s4 + $0x8] sm:$0xff]
    %v152 = vld [vmem:[%s4 + $0x10] sm:$0xff]
    %v153 = vld [vmem:[%s4 + $0x18] sm:$0xff]
    %v154 = vld [vmem:[%s4 + $0x20] sm:$0xff]
    %156 = vset.pattern.permute.xlu0 0
    %157 = vperm.xlu0 %156, %v150
    %v158 = vpop.permute.xlu0 %157
    %161 = vset.pattern.permute.xlu0 0
    %162 = vperm.xlu0 %161, %v151
    %v163 = vpop.permute.xlu0 %162
    %166 = vset.pattern.permute.xlu0 0
    %167 = vperm.xlu0 %166, %v152
    %v168 = vpop.permute.xlu0 %167
    %171 = vset.pattern.permute.xlu0 0
    %172 = vperm.xlu0 %171, %v153
    %v173 = vpop.permute.xlu0 %172
    %176 = vset.pattern.permute.xlu0 0
    %177 = vperm.xlu0 %176, %v154
    %v178 = vpop.permute.xlu0 %177
    %vm180 = vcmask 195584
    %v182 = vsel %vm180, %v145, 0
    %v185 = vsel %vm180, %v146, 0
    %v188 = vsel %vm180, %v147, 0
    %v191 = vsel %vm180, %v148, 0
    %v194 = vsel %vm180, %v149, 0
    %196 = vmatprep.subr.mxu0 0.0
    %197 = vmatpush1.msra.mxu0 %v142
    %198 = vmatprep.subr.mxu0 0.0
    %199 = vmatpush1.msra.mxu0 %v143
    %200 = vmatprep.subr.mxu0 0.0
    %201 = vmatpush1.msra.mxu0 %v144
    %202 = vmatprep.subr.mxu0 0.0
    %203 = vmatpush1.msra.mxu0 0.0
    %204 = vmatprep.subr.mxu0 0.0
    %205 = vmatpush1.msra.mxu0 0.0
    %206 = vmatprep.subr.mxu0 0.0
    %207 = vmatpush1.msra.mxu0 0.0
    %208 = vmatprep.subr.mxu0 0.0
    %209 = vmatpush1.msra.mxu0 0.0
    %210 = vmatprep.subr.mxu0 0.0
    %211 = vmatpush1.msra.mxu0 0.0
    %212 = vmatprep.subr.mxu0 0.0
    %213 = vmatpush1.msra.mxu0 0.0
    %214 = vmatprep.subr.mxu0 0.0
    %215 = vmatpush1.msra.mxu0 0.0
    %216 = vmatprep.subr.mxu0 0.0
    %217 = vmatpush1.msra.mxu0 0.0
    %218 = vmatprep.subr.mxu0 0.0
    %219 = vmatpush1.msra.mxu0 0.0
    %220 = vmatprep.subr.mxu0 0.0
    %221 = vmatpush1.msra.mxu0 0.0
    %222 = vmatprep.subr.mxu0 0.0
    %223 = vmatpush1.msra.mxu0 0.0
    %224 = vmatprep.subr.mxu0 0.0
    %225 = vmatpush1.msra.mxu0 0.0
    %226 = vmatprep.subr.mxu0 0.0
    %227 = vmatpush1.msra.mxu0 0.0
    %228 = vmatprep.subr.mxu0 0.0
    %229 = vmatpush1.msra.mxu0 0.0
    %230 = vmatprep.subr.mxu0 0.0
    %231 = vmatpush1.msra.mxu0 0.0
    %232 = vmatprep.subr.mxu0 0.0
    %233 = vmatpush1.msra.mxu0 0.0
    %234 = vmatprep.subr.mxu0 0.0
    %235 = vmatpush1.msra.mxu0 0.0
    %236 = vmatprep.subr.mxu0 0.0
    %237 = vmatpush1.msra.mxu0 0.0
    %238 = vmatprep.subr.mxu0 0.0
    %239 = vmatpush1.msra.mxu0 0.0
    %240 = vmatprep.subr.mxu0 0.0
    %241 = vmatpush1.msra.mxu0 0.0
    %242 = vmatprep.subr.mxu0 0.0
    %243 = vmatpush1.msra.mxu0 0.0
    %244 = vmatprep.subr.mxu0 0.0
    %245 = vmatpush1.msra.mxu0 0.0
    %246 = vmatprep.subr.mxu0 0.0
    %247 = vmatpush1.msra.mxu0 0.0
    %248 = vmatprep.subr.mxu0 0.0
    %249 = vmatpush1.msra.mxu0 0.0
    %250 = vmatprep.subr.mxu0 0.0
    %251 = vmatpush1.msra.mxu0 0.0
    %252 = vmatprep.subr.mxu0 0.0
    %253 = vmatpush1.msra.mxu0 0.0
    %254 = vmatprep.subr.mxu0 0.0
    %255 = vmatpush1.msra.mxu0 0.0
    %256 = vmatprep.subr.mxu0 0.0
    %257 = vmatpush1.msra.mxu0 0.0
    %258 = vmatprep.subr.mxu0 0.0
    %259 = vmatpush1.msra.mxu0 0.0
    %260 = vmatprep.mubr.f32.mxu0 0.0
    %261 = vmatmul.mubr.f32.gmra.mrb[0].mxu0 %v182
    %v262 = vpop.f32.mrb[0].mxu0
    %v263 = vadd.f32 %v158, %v262
    %v264 = vpop.f32.mrb[0].mxu0
    %265 = vmatprep.mubr.f32.mxu0 0.0
    %266 = vmatmul.mubr.f32.gmra.mrb[0].mxu0 %v185
    %v267 = vpop.f32.mrb[0].mxu0
    %v268 = vadd.f32 %v163, %v267
    %v269 = vpop.f32.mrb[0].mxu0
    %270 = vmatprep.mubr.f32.mxu0 0.0
    %271 = vmatmul.mubr.f32.gmra.mrb[0].mxu0 %v188
    %v272 = vpop.f32.mrb[0].mxu0
    %v273 = vadd.f32 %v168, %v272
    %v274 = vpop.f32.mrb[0].mxu0
    %275 = vmatprep.mubr.f32.mxu0 0.0
    %276 = vmatmul.mubr.f32.gmra.mrb[0].mxu0 %v191
    %v277 = vpop.f32.mrb[0].mxu0
    %v278 = vadd.f32 %v173, %v277
    %v279 = vpop.f32.mrb[0].mxu0
    %280 = vmatprep.mubr.f32.mxu0 0.0
    %281 = vmatmul.mubr.f32.gmra.mrb[0].mxu0 %v194
    %v282 = vpop.f32.mrb[0].mxu0
    %v283 = vadd.f32 %v178, %v282
    %v284 = vpop.f32.mrb[0].mxu0
    %285 = vdwg.mxu0
    %v286 = vmax.f32 %v263, 0.0
    %v287 = vmax.f32 %v268, 0.0
    %v288 = vmax.f32 %v273, 0.0
    %v289 = vmax.f32 %v278, 0.0
    %v290 = vmax.f32 %v283, 0.0
    %v291 = vld [vmem:[%s5] sm:$0x1f]
    %v292 = vld [vmem:[%s6] sm:$0x1f]
    %294 = vset.pattern.permute.xlu0 0
    %295 = vperm.xlu0 %294, %v292
    %v296 = vpop.permute.xlu0 %295
    %vm298 = vcmask 326656
    %v300 = vsel %vm298, %v291, 0
    %302 = vmatprep.subr.mxu0 0.0
    %303 = vmatpush1.msra.mxu0 %v286
    %304 = vmatprep.subr.mxu0 0.0
    %305 = vmatpush1.msra.mxu0 %v287
    %306 = vmatprep.subr.mxu0 0.0
    %307 = vmatpush1.msra.mxu0 %v288
    %308 = vmatprep.subr.mxu0 0.0
    %309 = vmatpush1.msra.mxu0 %v289
    %310 = vmatprep.subr.mxu0 0.0
    %311 = vmatpush1.msra.mxu0 %v290
    %312 = vmatprep.subr.mxu0 0.0
    %313 = vmatpush1.msra.mxu0 0.0
    %314 = vmatprep.subr.mxu0 0.0
    %315 = vmatpush1.msra.mxu0 0.0
    %316 = vmatprep.subr.mxu0 0.0
    %317 = vmatpush1.msra.mxu0 0.0
    %318 = vmatprep.subr.mxu0 0.0
    %319 = vmatpush1.msra.mxu0 0.0
    %320 = vmatprep.subr.mxu0 0.0
    %321 = vmatpush1.msra.mxu0 0.0
    %322 = vmatprep.subr.mxu0 0.0
    %323 = vmatpush1.msra.mxu0 0.0
    %324 = vmatprep.subr.mxu0 0.0
    %325 = vmatpush1.msra.mxu0 0.0
    %326 = vmatprep.subr.mxu0 0.0
    %327 = vmatpush1.msra.mxu0 0.0
    %328 = vmatprep.subr.mxu0 0.0
    %329 = vmatpush1.msra.mxu0 0.0
    %330 = vmatprep.subr.mxu0 0.0
    %331 = vmatpush1.msra.mxu0 0.0
    %332 = vmatprep.subr.mxu0 0.0
    %333 = vmatpush1.msra.mxu0 0.0
    %334 = vmatprep.subr.mxu0 0.0
    %335 = vmatpush1.msra.mxu0 0.0
    %336 = vmatprep.subr.mxu0 0.0
    %337 = vmatpush1.msra.mxu0 0.0
    %338 = vmatprep.subr.mxu0 0.0
    %339 = vmatpush1.msra.mxu0 0.0
    %340 = vmatprep.subr.mxu0 0.0
    %341 = vmatpush1.msra.mxu0 0.0
    %342 = vmatprep.subr.mxu0 0.0
    %343 = vmatpush1.msra.mxu0 0.0
    %344 = vmatprep.subr.mxu0 0.0
    %345 = vmatpush1.msra.mxu0 0.0
    %346 = vmatprep.subr.mxu0 0.0
    %347 = vmatpush1.msra.mxu0 0.0
    %348 = vmatprep.subr.mxu0 0.0
    %349 = vmatpush1.msra.mxu0 0.0
    %350 = vmatprep.subr.mxu0 0.0
    %351 = vmatpush1.msra.mxu0 0.0
    %352 = vmatprep.subr.mxu0 0.0
    %353 = vmatpush1.msra.mxu0 0.0
    %354 = vmatprep.subr.mxu0 0.0
    %355 = vmatpush1.msra.mxu0 0.0
    %356 = vmatprep.subr.mxu0 0.0
    %357 = vmatpush1.msra.mxu0 0.0
    %358 = vmatprep.subr.mxu0 0.0
    %359 = vmatpush1.msra.mxu0 0.0
    %360 = vmatprep.subr.mxu0 0.0
    %361 = vmatpush1.msra.mxu0 0.0
    %362 = vmatprep.subr.mxu0 0.0
    %363 = vmatpush1.msra.mxu0 0.0
    %364 = vmatprep.subr.mxu0 0.0
    %365 = vmatpush1.msra.mxu0 0.0
    %366 = vmatprep.mubr.f32.mxu0 0.0
    %367 = vmatmul.mubr.f32.gmra.mrb[0].mxu0 %v300
    %v368 = vpop.f32.mrb[0].mxu0
    %v369 = vadd.f32 %v296, %v368
    %v370 = vpop.f32.mrb[0].mxu0
    %371 = vdwg.mxu0
    %v372 = vtanh.pop %v369
    %vm373 = vcmask 61440
    %374 = vst.msk [vmem:[#allocation2] sm:$0x1f] %vm373, %v372
    // Predicated region
    $region30: #{tpu_custom_call.1} parent=1 // pred_check
      _
    $region31: #{tpu_custom_call.1} parent=1 // pred_check_branch
      %376 = sbr.rel (0) target = $region33
    $region32: #{tpu_custom_call.1} parent=1 // pred_region
      %s378 = ssub.s32 128, 128
      %379 = vsyncadd [#allocation3], %s378
      %s381 = sshll.u32 [#allocation2], 4
      %s382 = int_to_ptr.vmem [resolvable:$true] %s381
      %384 = dma.vmem_to_hbm [thread:$0]  %s382, 128, %s7, [#allocation3]
    $region33: #{tpu_custom_call.1} parent=1 // pred_fallthru
      _
    // Predicated region
    $region34: #{tpu_custom_call.1} parent=1 // pred_check
      _
    $region35: #{tpu_custom_call.1} parent=1 // pred_check_branch
      %386 = sbr.rel (0) target = $region37
    $region36: #{tpu_custom_call.1} parent=1 // pred_region
      %387 = dma.done [#allocation3], 128
    $region37: #{tpu_custom_call.1} parent=1 // pred_fallthru
      _
    %388 = vsyncpa [#allocation3], 1

</llo_original>
